<compile_context>
chip_gen: v7x
topology: tpu7x:2x2x1
jax: 0.10.0
libtpu: 0.0.40
codegen_flags: <defaults>
</compile_context>

<pallas_src>
import functools

import jax
import jax.numpy as jnp
from jax import lax
from jax.experimental import pallas as pl
from jax.experimental.pallas import tpu as pltpu

_NEG_SENTINEL = -1e30  # finite "minus infinity" (NaN-safe for masked tiles)


# ---------------------------------------------------------------------------
# Pass 1: fused QKV projection.
# ---------------------------------------------------------------------------
def _qkv_proj_kernel(x_ref, w_ref, q_ref, k_ref, v_ref):
    Hp = q_ref.shape[-1]
    # One (tp, C) x (C, 3*Hp) matmul; the 1/sqrt(H) scale is pre-folded into
    # the Q columns of the fused weight by the wrapper.
    proj = jnp.dot(x_ref[0], w_ref[...], preferred_element_type=jnp.float32)
    q_ref[0] = proj[:, 0:Hp].astype(q_ref.dtype)
    k_ref[0] = proj[:, Hp:2 * Hp].astype(k_ref.dtype)
    v_ref[0] = proj[:, 2 * Hp:3 * Hp].astype(v_ref.dtype)


# ---------------------------------------------------------------------------
# Pass 2: flash attention over lower-triangle tile pairs only.
# ---------------------------------------------------------------------------
def _flash_attn_kernel(qi_ref, ki_ref, q_ref, k_ref, v_ref, o_ref,
                       m_scr, l_scr, acc_scr, *, tq, tk):
    p_idx = pl.program_id(1)
    qi = qi_ref[p_idx]
    ki = ki_ref[p_idx]
    neg = jnp.float32(_NEG_SENTINEL)

    # ki == 0 is always the first kv tile visited for a given query tile
    # (pair enumeration is contiguous and ascending in ki per qi), so the
    # accumulators are re-initialized exactly once per (b, qi) group and the
    # -inf sentinel never survives past the first (always partially
    # unmasked) kv tile.
    @pl.when(ki == 0)
    def _init():
        m_scr[...] = jnp.full_like(m_scr, neg)
        l_scr[...] = jnp.zeros_like(l_scr)
        acc_scr[...] = jnp.zeros_like(acc_scr)

    q = q_ref[0]                        # (tq, Hp)  operand dtype, pre-scaled
    k = k_ref[0]                        # (tk, Hp)  operand dtype
    # q @ k^T without materializing a transpose (contract last dims).
    s = lax.dot_general(q, k, dimension_numbers=(((1,), (1,)), ((), ())),
                        preferred_element_type=jnp.float32)        # (tq, tk)

    # Causal mask only on diagonal-crossing tiles; strictly-below-diagonal
    # tiles skip the compare+select entirely.
    def _mask(s_in):
        row = qi * tq + lax.broadcasted_iota(jnp.int32, (tq, 1), 0)
        col = ki * tk + lax.broadcasted_iota(jnp.int32, (1, tk), 1)
        return jnp.where(col <= row, s_in, neg)

    s = lax.cond(ki * tk + (tk - 1) > qi * tq, _mask, lambda s_in: s_in, s)

    # Online softmax update (f32 accumulators in VMEM scratch).
    m_prev = m_scr[...]                                            # (tq, 1)
    m_new = jnp.maximum(m_prev, s.max(axis=-1, keepdims=True))
    alpha = jnp.exp(m_prev - m_new)
    p = jnp.exp(s - m_new)                                         # (tq, tk)
    l_scr[...] = alpha * l_scr[...] + p.sum(axis=-1, keepdims=True)
    acc_scr[...] = alpha * acc_scr[...] + jnp.dot(
        p.astype(v_ref.dtype), v_ref[0], preferred_element_type=jnp.float32)
    m_scr[...] = m_new

    # Last kv tile for this query tile -> normalize and emit.
    @pl.when(ki == (qi * tq + tq - 1) // tk)
    def _finalize():
        inv_l = pl.reciprocal(l_scr[...], approx=True)
        o_ref[0] = (acc_scr[...] * inv_l).astype(o_ref.dtype)


def _vmem_limit(estimate_bytes):
    # Explicit scoped-VMEM budget: estimate + slack, floored at the v5e
    # default (16 MiB) and capped well under v7x's 64 MiB physical VMEM.
    return int(min(max(estimate_bytes + (4 << 20), 16 << 20), 48 << 20))


def attention_forward(x, wk, wq, wv, *, tq=None, tk=None,
                      operand_dtype=jnp.bfloat16):
    """x: (B, T, C); wk/wq/wv: (C, H). Returns (B, T, H).

    Equivalent to the PyTorch Attention.forward in eval mode.
    """
    B, T, C = x.shape
    H = wq.shape[1]
    # Pad head dim to a full lane width: lane-dense projections, score/PV
    # matmuls and output stores.  Padded weight columns are zero, so padded
    # outputs are zero and the wrapper slice is exact.
    Hp = max(128, -(-H // 128) * 128)
    scale = H ** -0.5

    # Fused [q*scale | k | v] weight in the MXU operand dtype.
    wqkv = jnp.zeros((C, 3 * Hp), operand_dtype)
    wqkv = wqkv.at[:, 0:H].set((wq * scale).astype(operand_dtype))
    wqkv = wqkv.at[:, Hp:Hp + H].set(wk.astype(operand_dtype))
    wqkv = wqkv.at[:, 2 * Hp:2 * Hp + H].set(wv.astype(operand_dtype))
    x_op = x.astype(operand_dtype)

    # Capped tile defaults (VMEM-safe across v5e/v6e/v7x); must divide T.
    tq = min(T, 256) if tq is None else min(tq, T)
    tk = min(T, 256) if tk is None else min(tk, T)
    assert T % tq == 0 and T % tk == 0, "tile sizes must divide T"

    ob = jnp.dtype(operand_dtype).itemsize
    xb = jnp.dtype(x.dtype).itemsize

    # ----------------------- pass 1: QKV projection ------------------------
    tp = tq
    proj_est = (2 * tp * C * ob              # x blocks (double-buffered)
                + 2 * C * 3 * Hp * ob        # resident fused weight
                + 2 * 3 * tp * Hp * ob       # q/k/v output blocks
                + tp * 3 * Hp * 4)           # f32 projection temporary
    q, k, v = pl.pallas_call(
        _qkv_proj_kernel,
        out_shape=(jax.ShapeDtypeStruct((B, T, Hp), operand_dtype),
                   jax.ShapeDtypeStruct((B, T, Hp), operand_dtype),
                   jax.ShapeDtypeStruct((B, T, Hp), operand_dtype)),
        grid_spec=pltpu.PrefetchScalarGridSpec(
            num_scalar_prefetch=0,
            grid=(B, T // tp),
            in_specs=[
                pl.BlockSpec((1, tp, C), lambda b, i: (b, i, 0)),
                # fused weight: constant block index -> stays resident
                pl.BlockSpec((C, 3 * Hp), lambda b, i: (0, 0)),
            ],
            out_specs=(
                pl.BlockSpec((1, tp, Hp), lambda b, i: (b, i, 0)),
                pl.BlockSpec((1, tp, Hp), lambda b, i: (b, i, 0)),
                pl.BlockSpec((1, tp, Hp), lambda b, i: (b, i, 0)),
            ),
        ),
        compiler_params=pltpu.CompilerParams(
            dimension_semantics=("parallel", "parallel"),
            vmem_limit_bytes=_vmem_limit(proj_est)),
    )(x_op, wqkv)

    # --------- pass 2: flash attention, lower-triangle tiles only ----------
    nq, nk = T // tq, T // tk
    pairs = [(iq, ik) for iq in range(nq) for ik in range(nk)
             if ik * tk <= iq * tq + (tq - 1)]
    qi_arr = jnp.asarray([p[0] for p in pairs], dtype=jnp.int32)
    ki_arr = jnp.asarray([p[1] for p in pairs], dtype=jnp.int32)

    attn_est = (2 * tq * Hp * ob             # q blocks
                + 4 * tk * Hp * ob           # k + v blocks
                + 2 * tq * Hp * xb           # output blocks
                + tq * Hp * 4 + 2 * tq * 4   # scratch accumulators
                + 4 * tq * tk * 4)           # s / p / mask temporaries
    out = pl.pallas_call(
        functools.partial(_flash_attn_kernel, tq=tq, tk=tk),
        out_shape=jax.ShapeDtypeStruct((B, T, Hp), x.dtype),
        grid_spec=pltpu.PrefetchScalarGridSpec(
            num_scalar_prefetch=2,           # qi_arr, ki_arr -> SMEM
            grid=(B, len(pairs)),
            in_specs=[
                pl.BlockSpec((1, tq, Hp), lambda b, p, iq, ik: (b, iq[p], 0)),
                pl.BlockSpec((1, tk, Hp), lambda b, p, iq, ik: (b, ik[p], 0)),
                pl.BlockSpec((1, tk, Hp), lambda b, p, iq, ik: (b, ik[p], 0)),
            ],
            out_specs=pl.BlockSpec((1, tq, Hp),
                                   lambda b, p, iq, ik: (b, iq[p], 0)),
            scratch_shapes=[
                pltpu.VMEM((tq, 1), jnp.float32),    # running max m
                pltpu.VMEM((tq, 1), jnp.float32),    # running denom l
                pltpu.VMEM((tq, Hp), jnp.float32),   # output accumulator
            ],
        ),
        compiler_params=pltpu.CompilerParams(
            dimension_semantics=("parallel", "arbitrary"),
            vmem_limit_bytes=_vmem_limit(attn_est)),
    )(qi_arr, ki_arr, q, k, v)

    # Skip the wrapper slice when the head dim is already lane-aligned.
    return out if Hp == H else out[:, :, :H]


def _reference(x, wk, wq, wv):
    # pure-JAX f32 reference matching the PyTorch forward (eval mode)
    k = x @ wk
    q = x @ wq
    v = x @ wv
    att = (q @ jnp.swapaxes(k, -2, -1)) * (k.shape[-1] ** -0.5)
    T = x.shape[1]
    tril = jnp.tril(jnp.ones((T, T), dtype=bool))
    att = jnp.where(tril, att, -jnp.inf)
    att = jax.nn.softmax(att, axis=-1)
    return att @ v


if __name__ == "__main__":
    key = jax.random.PRNGKey(0)

    # --- shapes matching the module: batch=2, block_size T=8, embedding C=32,
    #     head_size H=16 ---
    B, T, C, H = 2, 8, 32, 16
    kx, kk, kq, kv, kx2 = jax.random.split(key, 5)
    x = jax.random.normal(kx, (B, T, C), dtype=jnp.float32)
    wk = jax.random.uniform(kk, (C, H), jnp.float32, -1.0, 1.0) * (C ** -0.5)
    wq = jax.random.uniform(kq, (C, H), jnp.float32, -1.0, 1.0) * (C ** -0.5)
    wv = jax.random.uniform(kv, (C, H), jnp.float32, -1.0, 1.0) * (C ** -0.5)

    out = jax.block_until_ready(attention_forward(x, wk, wq, wv))
    ref = _reference(x, wk, wq, wv)
    assert out.shape == (B, T, H)
    # bf16 MXU operands + approx reciprocal -> bf16-appropriate tolerance
    assert jnp.allclose(out, ref, atol=5e-2, rtol=5e-2), "mismatch vs reference"

    # --- second check: exercise the multi-tile flash path (lower-triangle
    #     pair enumeration, online softmax across kv tiles, diagonal-only
    #     masking) at a modest T ---
    B2, T2 = 2, 128
    x2 = jax.random.normal(kx2, (B2, T2, C), dtype=jnp.float32)
    out2 = jax.block_until_ready(attention_forward(x2, wk, wq, wv, tq=64, tk=64))
    ref2 = _reference(x2, wk, wq, wv)
    assert out2.shape == (B2, T2, H)
    assert jnp.allclose(out2, ref2, atol=5e-2, rtol=5e-2), \
        "mismatch vs reference (tiled)"

    print("KERNEL_OK")
</pallas_src>

<mosaic_0001>
module attributes {stable_mosaic.version = 11 : i64} {
  func.func @_qkv_proj_kernel(%arg0: i32, %arg1: i32, %arg2: memref<1x8x32xbf16, #tpu.memory_space<vmem>>, %arg3: memref<32x384xbf16, #tpu.memory_space<vmem>>, %arg4: memref<1x8x128xbf16, #tpu.memory_space<vmem>>, %arg5: memref<1x8x128xbf16, #tpu.memory_space<vmem>>, %arg6: memref<1x8x128xbf16, #tpu.memory_space<vmem>>) attributes {dimension_semantics = [#tpu.dimension_semantics<parallel>, #tpu.dimension_semantics<parallel>], iteration_bounds = array<i64: 2, 1>, scalar_prefetch = 0 : i64, scratch_operands = 0 : i64, tpu.core_type = #tpu.core_type<tc>, window_params = [{transform_indices = @transform_0, window_bounds = array<i64: 1, 8, 32>}, {pipeline_mode = #tpu.pipeline_mode<synchronous>, transform_indices = @transform_1, window_bounds = array<i64: 32, 384>}, {transform_indices = @transform_2, window_bounds = array<i64: 1, 8, 128>}, {transform_indices = @transform_3, window_bounds = array<i64: 1, 8, 128>}, {transform_indices = @transform_4, window_bounds = array<i64: 1, 8, 128>}]} {
    %c0 = arith.constant 0 : index
    %c0_0 = arith.constant 0 : index
    %c0_1 = arith.constant 0 : index
    %0 = vector.load %arg2[%c0, %c0_0, %c0_1] : memref<1x8x32xbf16, #tpu.memory_space<vmem>>, vector<1x8x32xbf16>
    %1 = vector.shape_cast %0 : vector<1x8x32xbf16> to vector<8x32xbf16>
    %c0_2 = arith.constant 0 : index
    %c0_3 = arith.constant 0 : index
    %2 = vector.load %arg3[%c0_2, %c0_3] : memref<32x384xbf16, #tpu.memory_space<vmem>>, vector<32x384xbf16>
    %cst = arith.constant dense<0.000000e+00> : vector<8x384xf32>
    %3 = tpu.matmul %1, %2, %cst {dimension_numbers = #tpu.dot_dimension_numbers<[1], [0], [0], [1], [0, 0, 1, 1], [], []>} : vector<8x32xbf16>, vector<32x384xbf16>, vector<8x384xf32> -> vector<8x384xf32>
    %4 = vector.extract_strided_slice %3 {offsets = [0, 0], sizes = [8, 128], strides = [1, 1]} : vector<8x384xf32> to vector<8x128xf32>
    %5 = arith.truncf %4 : vector<8x128xf32> to vector<8x128xbf16>
    %c0_4 = arith.constant 0 : index
    %c0_5 = arith.constant 0 : index
    %c0_6 = arith.constant 0 : index
    %6 = vector.load %arg4[%c0_4, %c0_5, %c0_6] : memref<1x8x128xbf16, #tpu.memory_space<vmem>>, vector<1x8x128xbf16>
    %7 = vector.shape_cast %6 : vector<1x8x128xbf16> to vector<8x128xbf16>
    %8 = vector.shape_cast %5 : vector<8x128xbf16> to vector<1x8x128xbf16>
    tpu.vector_store %arg4[%c0_4, %c0_5, %c0_6], %8 {strides = array<i32>} : memref<1x8x128xbf16, #tpu.memory_space<vmem>>, vector<1x8x128xbf16>,
    %9 = vector.extract_strided_slice %3 {offsets = [0, 128], sizes = [8, 128], strides = [1, 1]} : vector<8x384xf32> to vector<8x128xf32>
    %10 = arith.truncf %9 : vector<8x128xf32> to vector<8x128xbf16>
    %c0_7 = arith.constant 0 : index
    %c0_8 = arith.constant 0 : index
    %c0_9 = arith.constant 0 : index
    %11 = vector.load %arg5[%c0_7, %c0_8, %c0_9] : memref<1x8x128xbf16, #tpu.memory_space<vmem>>, vector<1x8x128xbf16>
    %12 = vector.shape_cast %11 : vector<1x8x128xbf16> to vector<8x128xbf16>
    %13 = vector.shape_cast %10 : vector<8x128xbf16> to vector<1x8x128xbf16>
    tpu.vector_store %arg5[%c0_7, %c0_8, %c0_9], %13 {strides = array<i32>} : memref<1x8x128xbf16, #tpu.memory_space<vmem>>, vector<1x8x128xbf16>,
    %14 = vector.extract_strided_slice %3 {offsets = [0, 256], sizes = [8, 128], strides = [1, 1]} : vector<8x384xf32> to vector<8x128xf32>
    %15 = arith.truncf %14 : vector<8x128xf32> to vector<8x128xbf16>
    %c0_10 = arith.constant 0 : index
    %c0_11 = arith.constant 0 : index
    %c0_12 = arith.constant 0 : index
    %16 = vector.load %arg6[%c0_10, %c0_11, %c0_12] : memref<1x8x128xbf16, #tpu.memory_space<vmem>>, vector<1x8x128xbf16>
    %17 = vector.shape_cast %16 : vector<1x8x128xbf16> to vector<8x128xbf16>
    %18 = vector.shape_cast %15 : vector<8x128xbf16> to vector<1x8x128xbf16>
    tpu.vector_store %arg6[%c0_10, %c0_11, %c0_12], %18 {strides = array<i32>} : memref<1x8x128xbf16, #tpu.memory_space<vmem>>, vector<1x8x128xbf16>,
    return
  }
  func.func @transform_0(%arg0: i32, %arg1: i32) -> (i32, i32, i32) {
    %c0_i32 = arith.constant 0 : i32
    %c0_i32_0 = arith.constant 0 : i32
    return %arg0, %arg1, %c0_i32 : i32, i32, i32
  }
  func.func @transform_1(%arg0: i32, %arg1: i32) -> (i32, i32) {
    %c0_i32 = arith.constant 0 : i32
    %c0_i32_0 = arith.constant 0 : i32
    %c0_i32_1 = arith.constant 0 : i32
    return %c0_i32, %c0_i32_0 : i32, i32
  }
  func.func @transform_2(%arg0: i32, %arg1: i32) -> (i32, i32, i32) {
    %c0_i32 = arith.constant 0 : i32
    %c0_i32_0 = arith.constant 0 : i32
    return %arg0, %arg1, %c0_i32 : i32, i32, i32
  }
  func.func @transform_3(%arg0: i32, %arg1: i32) -> (i32, i32, i32) {
    %c0_i32 = arith.constant 0 : i32
    %c0_i32_0 = arith.constant 0 : i32
    return %arg0, %arg1, %c0_i32 : i32, i32, i32
  }
  func.func @transform_4(%arg0: i32, %arg1: i32) -> (i32, i32, i32) {
    %c0_i32 = arith.constant 0 : i32
    %c0_i32_0 = arith.constant 0 : i32
    return %arg0, %arg1, %c0_i32 : i32, i32, i32
  }
}

</mosaic_0001>

<llo_original>
// kernel: tpu_custom_call.1
$region0: #{tpu_custom_call.1}
  #allocation0 [shape = 'u32[]', space=smem, size = 0x4, offset = 0x4, fixed_abs, tag = 'smem constant byte address 0x4 - core index']
  #allocation1 [shape = 'u32[144,128]{1,0:T(1,128)}', space=vmem, size = 0x12000, scoped, tag = 'internal scratch']
  %s0 = inlined_call_operand.hbm [shape: bf16[2,8,32], index: 0, kind: input, shape index: {}]
  %s1 = inlined_call_operand.hbm [shape: bf16[32,384], index: 1, kind: input, shape index: {}]
  %s2 = inlined_call_operand.hbm [shape: bf16[2,8,128], index: 2, kind: output, shape index: {0}]
  %s3 = inlined_call_operand.hbm [shape: bf16[2,8,128], index: 3, kind: output, shape index: {1}]
  %s4 = inlined_call_operand.hbm [shape: bf16[2,8,128], index: 4, kind: output, shape index: {2}]
  %5 = xla_tuple %s2, %s3, %s4
  %s6 = sld [smem:[#allocation0]]
  $region65: #{tpu_custom_call.1} parent=0
    _
  %s8 = ssub.s32 1, %s6
  %s9 = scalar_select 0, %s8, %s6
  $region1: #{tpu_custom_call.1} parent=0
    #allocation2 [shape = 'u8[4096]{0}', space=vmem, size = 0x1000, scoped, tag = 'input window, operand 0']
    #allocation3 [shape = 's32[2]{0}', space=sflag, size = 0x8, scoped, tag = 'scoped memory for tpu_custom_call.1']
    #allocation4 [shape = 's32[2]{0}', space=sflag, size = 0x8, scoped, tag = 'scoped memory for tpu_custom_call.1']
    #allocation5 [shape = 'u8[24576]{0}', space=vmem, size = 0x6000, scoped, tag = 'input window, operand 1, single buffered']
    #allocation6 [shape = 's32[1]{0}', space=sflag, size = 0x4, scoped, tag = 'scoped memory for tpu_custom_call.1']
    #allocation7 [shape = 'u8[4096]{0}', space=vmem, size = 0x1000, scoped, tag = 'output window, operand 0']
    #allocation8 [shape = 'u8[4096]{0}', space=vmem, size = 0x1000, scoped, tag = 'output window, operand 1']
    #allocation9 [shape = 's32[2]{0}', space=sflag, size = 0x8, scoped, tag = 'scoped memory for tpu_custom_call.1']
    #allocation10 [shape = 'u8[4096]{0}', space=vmem, size = 0x1000, scoped, tag = 'output window, operand 2']
    %10 = vsyncpa [#allocation3], 0
    %s11 = scalar_lea.sflag [#allocation3], 1
    %12 = vsyncpa %s11, 0
    %13 = vsyncpa [#allocation6], 0
    %14 = vsyncpa [#allocation4], 0
    %s15 = scalar_lea.sflag [#allocation4], 1
    %16 = vsyncpa %s15, 0
    %17 = vsyncpa [#allocation9], 0
    %s18 = scalar_lea.sflag [#allocation9], 1
    %19 = vsyncpa %s18, 0
    loop: start=0, step=1, limit=4
    $region2: #{tpu_custom_call.1} parent=1 // loop_pre_header
      _
    $region3: #{tpu_custom_call.1} parent=1 // loop_header
      %s21 = sphi 0, %s25
      %p22 = scmp.ge.s32.totalorder %s21, 4
      %s28 = sphi 0, %s40
      %s29 = sphi 0, %s36
      %s30 = sphi 0, %s28
      %s31 = sphi 0, %s29
      %s32 = sphi 0, %s30
      %s33 = sphi 0, %s31
      %s45 = sphi 0, %s47
      %s48 = sphi 0, %s45
      %s49 = sphi 0, %s48
      %s65 = sphi 0, %s49
      %s69 = sphi 0, %s69
      %s71 = sphi 0, %s69
      %s72 = sphi 0, %s71
      %s86 = sphi 0, %s72
      %s94 = sphi 0, %s96
      %s97 = sphi 0, %s94
      %s98 = sphi 0, %s97
      %s114 = sphi 0, %s98
      %s122 = sphi 0, %s124
      %s125 = sphi 0, %s122
      %s126 = sphi 0, %s125
      %s142 = sphi 0, %s126
      %s150 = sphi 0, %s152
      %s153 = sphi 0, %s150
      %s154 = sphi 0, %s153
      %s170 = sphi 0, %s154
    $region4: #{tpu_custom_call.1} parent=1 // loop_header_branch
      %24 = sbr.rel (%p22) target = $region8
    $region5: #{tpu_custom_call.1} parent=1 // loop_body
      %s26 = ssub.s32 %s21, 1
      %s27 = ssub.s32 %s21, 2
      %s34 = sadd.s32 1, %s29
      %p35 = scmp.ge.s32.totalorder %s34, 1
      %s36 = scalar_select %p35, 0, %s34
      %s37 = sadd.s32 1, %s28
      %s38 = scalar_select %p35, %s37, %s28
      %p39 = scmp.ge.s32.totalorder %s38, 2
      %s40 = scalar_select %p39, 0, %s38
      %s41 = ssub.s32 %s28, %s40
      %s42 = ssub.s32 %s29, %s36
      %s43 = sor.u32 %s41, %s42
      %p44 = scmp.eq.s32.totalorder %s43, 0
      %s46 = sadd.s32 %s45, 1
      %s47 = scalar_select %p44, %s45, %s46
      %p50 = pneg %p44
      %p51 = scmp.eq.s32.totalorder %s21, 1
      %p52 = por %p50, %p51
      %p53 = scmp.ne.s32.totalorder %s45, %s48
      %p54 = scmp.eq.s32.totalorder %s21, 0
      %p55 = por %p53, %p54
      %p56 = scmp.ne.s32.totalorder %s45, %s48
      %p57 = scmp.eq.s32.totalorder %s26, 1
      %p58 = por %p56, %p57
      %p59 = scmp.ne.s32.totalorder %s48, %s49
      %p60 = scmp.eq.s32.totalorder %s26, 0
      %p61 = por %p59, %p60
      %p62 = scmp.ne.s32.totalorder %s48, %s49
      %p63 = scmp.eq.s32.totalorder %s27, 1
      %p64 = por %p62, %p63
      %p66 = scmp.ne.s32.totalorder %s49, %s65
      %p67 = scmp.eq.s32.totalorder %s27, 0
      %p68 = por %p66, %p67
      %s70 = sadd.s32 %s69, 1
      %p73 = scmp.eq.s32.totalorder %s21, 1
      %p74 = scmp.ne.s32.totalorder %s69, %s71
      %p75 = scmp.eq.s32.totalorder %s21, 0
      %p76 = por %p74, %p75
      %p77 = scmp.ne.s32.totalorder %s69, %s71
      %p78 = scmp.eq.s32.totalorder %s26, 1
      %p79 = por %p77, %p78
      %p80 = scmp.ne.s32.totalorder %s71, %s72
      %p81 = scmp.eq.s32.totalorder %s26, 0
      %p82 = por %p80, %p81
      %p83 = scmp.ne.s32.totalorder %s71, %s72
      %p84 = scmp.eq.s32.totalorder %s27, 1
      %p85 = por %p83, %p84
      %p87 = scmp.ne.s32.totalorder %s72, %s86
      %p88 = scmp.eq.s32.totalorder %s27, 0
      %p89 = por %p87, %p88
      %s90 = ssub.s32 %s28, %s40
      %s91 = ssub.s32 %s29, %s36
      %s92 = sor.u32 %s90, %s91
      %p93 = scmp.eq.s32.totalorder %s92, 0
      %s95 = sadd.s32 %s94, 1
      %s96 = scalar_select %p93, %s94, %s95
      %p99 = pneg %p93
      %p100 = scmp.eq.s32.totalorder %s21, 1
      %p101 = por %p99, %p100
      %p102 = scmp.ne.s32.totalorder %s94, %s97
      %p103 = scmp.eq.s32.totalorder %s21, 0
      %p104 = por %p102, %p103
      %p105 = scmp.ne.s32.totalorder %s94, %s97
      %p106 = scmp.eq.s32.totalorder %s26, 1
      %p107 = por %p105, %p106
      %p108 = scmp.ne.s32.totalorder %s97, %s98
      %p109 = scmp.eq.s32.totalorder %s26, 0
      %p110 = por %p108, %p109
      %p111 = scmp.ne.s32.totalorder %s97, %s98
      %p112 = scmp.eq.s32.totalorder %s27, 1
      %p113 = por %p111, %p112
      %p115 = scmp.ne.s32.totalorder %s98, %s114
      %p116 = scmp.eq.s32.totalorder %s27, 0
      %p117 = por %p115, %p116
      %s118 = ssub.s32 %s28, %s40
      %s119 = ssub.s32 %s29, %s36
      %s120 = sor.u32 %s118, %s119
      %p121 = scmp.eq.s32.totalorder %s120, 0
      %s123 = sadd.s32 %s122, 1
      %s124 = scalar_select %p121, %s122, %s123
      %p127 = pneg %p121
      %p128 = scmp.eq.s32.totalorder %s21, 1
      %p129 = por %p127, %p128
      %p130 = scmp.ne.s32.totalorder %s122, %s125
      %p131 = scmp.eq.s32.totalorder %s21, 0
      %p132 = por %p130, %p131
      %p133 = scmp.ne.s32.totalorder %s122, %s125
      %p134 = scmp.eq.s32.totalorder %s26, 1
      %p135 = por %p133, %p134
      %p136 = scmp.ne.s32.totalorder %s125, %s126
      %p137 = scmp.eq.s32.totalorder %s26, 0
      %p138 = por %p136, %p137
      %p139 = scmp.ne.s32.totalorder %s125, %s126
      %p140 = scmp.eq.s32.totalorder %s27, 1
      %p141 = por %p139, %p140
      %p143 = scmp.ne.s32.totalorder %s126, %s142
      %p144 = scmp.eq.s32.totalorder %s27, 0
      %p145 = por %p143, %p144
      %s146 = ssub.s32 %s28, %s40
      %s147 = ssub.s32 %s29, %s36
      %s148 = sor.u32 %s146, %s147
      %p149 = scmp.eq.s32.totalorder %s148, 0
      %s151 = sadd.s32 %s150, 1
      %s152 = scalar_select %p149, %s150, %s151
      %p155 = pneg %p149
      %p156 = scmp.eq.s32.totalorder %s21, 1
      %p157 = por %p155, %p156
      %p158 = scmp.ne.s32.totalorder %s150, %s153
      %p159 = scmp.eq.s32.totalorder %s21, 0
      %p160 = por %p158, %p159
      %p161 = scmp.ne.s32.totalorder %s150, %s153
      %p162 = scmp.eq.s32.totalorder %s26, 1
      %p163 = por %p161, %p162
      %p164 = scmp.ne.s32.totalorder %s153, %s154
      %p165 = scmp.eq.s32.totalorder %s26, 0
      %p166 = por %p164, %p165
      %p167 = scmp.ne.s32.totalorder %s153, %s154
      %p168 = scmp.eq.s32.totalorder %s27, 1
      %p169 = por %p167, %p168
      %p171 = scmp.ne.s32.totalorder %s154, %s170
      %p172 = scmp.eq.s32.totalorder %s27, 0
      %p173 = por %p171, %p172
      %p174 = scmp.le.s32.totalorder 1, %s21
      %p175 = scmp.lt.s32.totalorder %s21, 3
      %p176 = pnand %p174, %p175
      %p177 = pneg %p176
      // Predicated region
      $region9: #{tpu_custom_call.1} parent=5 // pred_check
        _
      $region10: #{tpu_custom_call.1} parent=5 // pred_check_branch
        %179 = sbr.rel (%p176) target = $region12
      $region11: #{tpu_custom_call.1} parent=5 // pred_region
        %s180 = ssub.s32 %s21, 1
        // Predicated region
        $region13: #{tpu_custom_call.1} parent=11 // pred_check
          %p181 = pneg %p82
        $region14: #{tpu_custom_call.1} parent=11 // pred_check_branch
          %183 = sbr.rel (%p181) target = $region16
        $region15: #{tpu_custom_call.1} parent=11 // pred_region
          %s185 = ssub.s32 768, 768
          %186 = vsyncadd [#allocation6], %s185
          %s187 = sshll.u32 [#allocation5], 4
          %s188 = int_to_ptr.vmem [resolvable:$true] %s187
          %193 = dma.hbm_to_vmem [thread:$0]  %s1, 768, %s188, [#allocation6], 192, 192, 12
        $region16: #{tpu_custom_call.1} parent=11 // pred_fallthru
          _
      $region12: #{tpu_custom_call.1} parent=5 // pred_fallthru
        _
      %p194 = scmp.lt.s32.totalorder %s21, 2
      // Predicated region
      $region17: #{tpu_custom_call.1} parent=5 // pred_check
        %p195 = pneg %p194
      $region18: #{tpu_custom_call.1} parent=5 // pred_check_branch
        %197 = sbr.rel (%p195) target = $region20
      $region19: #{tpu_custom_call.1} parent=5 // pred_region
        // Predicated region
        $region21: #{tpu_custom_call.1} parent=19 // pred_check
          %p198 = pneg %p55
        $region22: #{tpu_custom_call.1} parent=19 // pred_check_branch
          %200 = sbr.rel (%p198) target = $region24
        $region23: #{tpu_custom_call.1} parent=19 // pred_region
          %s201 = sand.u32 %s45, 1
          %s202 = scalar_lea.sflag [#allocation3], %s201
          %s203 = sand.u32 %s45, 1
          %s204 = smul.addr %s203, 4
          %s205 = scalar_lea.vmem [#allocation2], %s204
          %s207 = ssub.s32 64, 64
          %208 = vsyncadd %s202, %s207
          %s209 = sadd.s32 %s29, %s28
          %s210 = smul.addr %s209, 64
          %s211 = scalar_lea.hbm %s0, %s210
          %s213 = sshll.u32 %s205, 4
          %s214 = int_to_ptr.vmem [resolvable:$true] %s213
          %216 = dma.hbm_to_vmem [thread:$0]  %s211, 64, %s214, %s202
        $region24: #{tpu_custom_call.1} parent=19 // pred_fallthru
          _
      $region20: #{tpu_custom_call.1} parent=5 // pred_fallthru
        _
      %p217 = scmp.le.s32.totalorder 1, %s21
      %p218 = scmp.lt.s32.totalorder %s21, 3
      %p219 = pnand %p217, %p218
      %p220 = pneg %p219
      // Predicated region
      $region25: #{tpu_custom_call.1} parent=5 // pred_check
        _
      $region26: #{tpu_custom_call.1} parent=5 // pred_check_branch
        %222 = sbr.rel (%p219) target = $region28
      $region27: #{tpu_custom_call.1} parent=5 // pred_region
        %s223 = ssub.s32 %s21, 1
        %s224 = sand.u32 %s48, 1
        %s225 = scalar_lea.sflag [#allocation3], %s224
        %s226 = sand.u32 %s48, 1
        %s227 = smul.addr %s226, 4
        %s228 = scalar_lea.vmem [#allocation2], %s227
        // Predicated region
        $region29: #{tpu_custom_call.1} parent=27 // pred_check
          %p229 = pneg %p61
        $region30: #{tpu_custom_call.1} parent=27 // pred_check_branch
          %231 = sbr.rel (%p229) target = $region32
        $region31: #{tpu_custom_call.1} parent=27 // pred_region
          %232 = dma.done %s225, 64
        $region32: #{tpu_custom_call.1} parent=27 // pred_fallthru
          _
        // Predicated region
        $region33: #{tpu_custom_call.1} parent=27 // pred_check
          %p233 = pneg %p82
        $region34: #{tpu_custom_call.1} parent=27 // pred_check_branch
          %235 = sbr.rel (%p233) target = $region36
        $region35: #{tpu_custom_call.1} parent=27 // pred_region
          %236 = dma.done [#allocation6], 768
        $region36: #{tpu_custom_call.1} parent=27 // pred_fallthru
          _
        %s237 = sand.u32 %s48, 1
        %s238 = scalar_lea.sflag [#allocation3], %s237
        %s239 = sand.u32 %s48, 1
        %s240 = smul.addr %s239, 4
        %s241 = scalar_lea.vmem [#allocation2], %s240
        %p242 = pneg %p61
        %p243 = pneg %p58
        %p244 = pneg %p82
        %p245 = pneg %p79
        %p246 = pneg %p110
        %p247 = pneg %p107
        %s248 = sand.u32 %s97, 1
        %s249 = scalar_lea.sflag [#allocation4], %s248
        %s250 = sand.u32 %s97, 1
        %s251 = smul.addr %s250, 4
        %s252 = scalar_lea.vmem [#allocation7], %s251
        %p253 = pneg %p138
        %p254 = pneg %p135
        %s255 = sand.u32 %s26, 1
        %s256 = scalar_lea.sflag [#allocation9], %s255
        %s257 = sand.u32 %s125, 1
        %s258 = smul.addr %s257, 4
        %s259 = scalar_lea.vmem [#allocation8], %s258
        %p260 = pneg %p166
        %p261 = pneg %p163
        %s262 = sand.u32 %s26, 1
        %s263 = scalar_lea.sflag [#allocation9], %s262
        %s264 = sand.u32 %s153, 1
        %s265 = smul.addr %s264, 4
        %s266 = scalar_lea.vmem [#allocation10], %s265
        %v268 = vld [vmem:[%s228] sm:$0xf]
        %v269 = vld [vmem:[#allocation5] sm:$0xff]
        %v270 = vld [vmem:[#allocation5 + $0x8] sm:$0xf]
        %v271 = vld [vmem:[#allocation5 + $0xc] sm:$0xff]
        %v272 = vld [vmem:[#allocation5 + $0x14] sm:$0xf]
        %v273 = vld [vmem:[#allocation5 + $0x18] sm:$0xff]
        %v274 = vld [vmem:[#allocation5 + $0x20] sm:$0xf]
        %v275 = vld [vmem:[#allocation5 + $0x24] sm:$0xff]
        %v276 = vld [vmem:[#allocation5 + $0x2c] sm:$0xf]
        %v285 = vunpack.c.l.b16 %v269
        %v286 = vunpack.c.h.b16 %v269
        %v287 = vunpack.c.l.b16 %v270
        %v288 = vunpack.c.l.b16 %v271
        %v289 = vunpack.c.h.b16 %v271
        %v290 = vunpack.c.l.b16 %v272
        %v291 = vunpack.c.l.b16 %v273
        %v292 = vunpack.c.h.b16 %v273
        %v293 = vunpack.c.l.b16 %v274
        %v294 = vunpack.c.l.b16 %v275
        %v295 = vunpack.c.h.b16 %v275
        %v296 = vunpack.c.l.b16 %v276
        %v297 = vpack.c.b16 %v288, %v285
        %v298 = vpack.c.b16 %v289, %v286
        %v299 = vpack.c.b16 %v290, %v287
        %v300 = vpack.c.b16 %v294, %v291
        %v301 = vpack.c.b16 %v295, %v292
        %v302 = vpack.c.b16 %v296, %v293
        %vm309 = vcmask 261120
        %v311 = vsel %vm309, %v268, 0
        %313 = vmatprep.subr.bf16.mxu0 %v298
        %314 = vmatpush1.bf16.msra.mxu0 %v297
        %315 = vmatprep.subr.bf16.mxu0 %v301
        %316 = vmatpush1.bf16.msra.mxu0 %v300
        %317 = vmatprep.subr.bf16.mxu0 0
        %318 = vmatpush1.bf16.msra.mxu0 0
        %319 = vmatprep.subr.bf16.mxu0 0
        %320 = vmatpush1.bf16.msra.mxu0 0
        %321 = vmatprep.subr.bf16.mxu0 0
        %322 = vmatpush1.bf16.msra.mxu0 0
        %323 = vmatprep.subr.bf16.mxu0 0
        %324 = vmatpush1.bf16.msra.mxu0 0
        %325 = vmatprep.subr.bf16.mxu0 0
        %326 = vmatpush1.bf16.msra.mxu0 0
        %327 = vmatprep.subr.bf16.mxu0 0
        %328 = vmatpush1.bf16.msra.mxu0 0
        %329 = vmatprep.subr.bf16.mxu0 0
        %330 = vmatpush1.bf16.msra.mxu0 0
        %331 = vmatprep.subr.bf16.mxu0 0
        %332 = vmatpush1.bf16.msra.mxu0 0
        %333 = vmatprep.subr.bf16.mxu0 0
        %334 = vmatpush1.bf16.msra.mxu0 0
        %335 = vmatprep.subr.bf16.mxu0 0
        %336 = vmatpush1.bf16.msra.mxu0 0
        %337 = vmatprep.subr.bf16.mxu0 0
        %338 = vmatpush1.bf16.msra.mxu0 0
        %339 = vmatprep.subr.bf16.mxu0 0
        %340 = vmatpush1.bf16.msra.mxu0 0
        %341 = vmatprep.subr.bf16.mxu0 0
        %342 = vmatpush1.bf16.msra.mxu0 0
        %343 = vmatprep.subr.bf16.mxu0 0
        %344 = vmatpush1.bf16.msra.mxu0 0
        %345 = vmatprep.mubr.bf16.mxu0 0
        %346 = vmatmul.mubr.bf16.gmra.mrb[0].mxu0 %v311
        %v347 = vpop.f32.mrb[0].mxu0
        %v348 = vadd.f32 0.0, %v347
        %v349 = vpop.f32.mrb[0].mxu0
        %v350 = vadd.f32 0.0, %v349
        %v351 = vpop.f32.mrb[0].mxu0
        %v352 = vpop.f32.mrb[0].mxu0
        %353 = vdwg.mxu0
        %354 = vmatprep.subr.bf16.mxu0 0
        %355 = vmatpush1.bf16.msra.mxu0 %v299
        %356 = vmatprep.subr.bf16.mxu0 0
        %357 = vmatpush1.bf16.msra.mxu0 %v302
        %358 = vmatprep.subr.bf16.mxu0 0
        %359 = vmatpush1.bf16.msra.mxu0 0
        %360 = vmatprep.subr.bf16.mxu0 0
        %361 = vmatpush1.bf16.msra.mxu0 0
        %362 = vmatprep.subr.bf16.mxu0 0
        %363 = vmatpush1.bf16.msra.mxu0 0
        %364 = vmatprep.subr.bf16.mxu0 0
        %365 = vmatpush1.bf16.msra.mxu0 0
        %366 = vmatprep.subr.bf16.mxu0 0
        %367 = vmatpush1.bf16.msra.mxu0 0
        %368 = vmatprep.subr.bf16.mxu0 0
        %369 = vmatpush1.bf16.msra.mxu0 0
        %370 = vmatprep.subr.bf16.mxu0 0
        %371 = vmatpush1.bf16.msra.mxu0 0
        %372 = vmatprep.subr.bf16.mxu0 0
        %373 = vmatpush1.bf16.msra.mxu0 0
        %374 = vmatprep.subr.bf16.mxu0 0
        %375 = vmatpush1.bf16.msra.mxu0 0
        %376 = vmatprep.subr.bf16.mxu0 0
        %377 = vmatpush1.bf16.msra.mxu0 0
        %378 = vmatprep.subr.bf16.mxu0 0
        %379 = vmatpush1.bf16.msra.mxu0 0
        %380 = vmatprep.subr.bf16.mxu0 0
        %381 = vmatpush1.bf16.msra.mxu0 0
        %382 = vmatprep.subr.bf16.mxu0 0
        %383 = vmatpush1.bf16.msra.mxu0 0
        %384 = vmatprep.subr.bf16.mxu0 0
        %385 = vmatpush1.bf16.msra.mxu0 0
        %386 = vmatprep.mubr.bf16.mxu0 0
        %387 = vmatmul.mubr.bf16.gmra.mrb[0].mxu0 %v311
        %v388 = vpop.f32.mrb[0].mxu0
        %v389 = vadd.f32 0.0, %v388
        %v390 = vpop.f32.mrb[0].mxu0
        %v391 = vpop.f32.mrb[0].mxu0
        %v392 = vpop.f32.mrb[0].mxu0
        %393 = vdwg.mxu0
        %v394 = vpack.c.bf16 %v348, %v348
        %395 = vst [vmem:[%s252] sm:$0xf] %v394
        %v396 = vpack.c.bf16 %v350, %v350
        %397 = vst [vmem:[%s259] sm:$0xf] %v396
        %v398 = vpack.c.bf16 %v389, %v389
        %399 = vst [vmem:[%s266] sm:$0xf] %v398
        %s400 = sand.u32 %s97, 1
        %s401 = scalar_lea.sflag [#allocation4], %s400
        %s402 = sand.u32 %s97, 1
        %s403 = smul.addr %s402, 4
        %s404 = scalar_lea.vmem [#allocation7], %s403
        %s405 = sand.u32 %s26, 1
        %s406 = scalar_lea.sflag [#allocation9], %s405
        %s407 = sand.u32 %s125, 1
        %s408 = smul.addr %s407, 4
        %s409 = scalar_lea.vmem [#allocation8], %s408
        %s410 = sand.u32 %s26, 1
        %s411 = scalar_lea.sflag [#allocation9], %s410
        %s412 = sand.u32 %s153, 1
        %s413 = smul.addr %s412, 4
        %s414 = scalar_lea.vmem [#allocation10], %s413
        // Predicated region
        $region37: #{tpu_custom_call.1} parent=27 // pred_check
          %p415 = pneg %p107
        $region38: #{tpu_custom_call.1} parent=27 // pred_check_branch
          %417 = sbr.rel (%p415) target = $region40
        $region39: #{tpu_custom_call.1} parent=27 // pred_region
          %s419 = ssub.s32 64, 64
          %420 = vsyncadd %s401, %s419
          %s421 = sadd.s32 %s31, %s30
          %s422 = smul.addr %s421, 64
          %s423 = scalar_lea.hbm %s2, %s422
          %s425 = sshll.u32 %s404, 4
          %s426 = int_to_ptr.vmem [resolvable:$true] %s425
          %428 = dma.vmem_to_hbm [thread:$0]  %s426, 64, %s423, %s401
        $region40: #{tpu_custom_call.1} parent=27 // pred_fallthru
          _
        // Predicated region
        $region41: #{tpu_custom_call.1} parent=27 // pred_check
          %p429 = pneg %p135
        $region42: #{tpu_custom_call.1} parent=27 // pred_check_branch
          %431 = sbr.rel (%p429) target = $region44
        $region43: #{tpu_custom_call.1} parent=27 // pred_region
          %s433 = ssub.s32 64, 64
          %434 = vsyncadd %s406, %s433
          %s435 = sadd.s32 %s31, %s30
          %s436 = smul.addr %s435, 64
          %s437 = scalar_lea.hbm %s3, %s436
          %s439 = sshll.u32 %s409, 4
          %s440 = int_to_ptr.vmem [resolvable:$true] %s439
          %442 = dma.vmem_to_hbm [thread:$0]  %s440, 64, %s437, %s406
        $region44: #{tpu_custom_call.1} parent=27 // pred_fallthru
          _
        // Predicated region
        $region45: #{tpu_custom_call.1} parent=27 // pred_check
          %p443 = pneg %p163
        $region46: #{tpu_custom_call.1} parent=27 // pred_check_branch
          %445 = sbr.rel (%p443) target = $region48
        $region47: #{tpu_custom_call.1} parent=27 // pred_region
          %s447 = ssub.s32 64, 64
          %448 = vsyncadd %s411, %s447
          %s449 = sadd.s32 %s31, %s30
          %s450 = smul.addr %s449, 64
          %s451 = scalar_lea.hbm %s4, %s450
          %s453 = sshll.u32 %s414, 4
          %s454 = int_to_ptr.vmem [resolvable:$true] %s453
          %456 = dma.vmem_to_hbm [thread:$0]  %s454, 64, %s451, %s411
        $region48: #{tpu_custom_call.1} parent=27 // pred_fallthru
          _
      $region28: #{tpu_custom_call.1} parent=5 // pred_fallthru
        _
      %p457 = scmp.le.s32.totalorder 2, %s21
      // Predicated region
      $region49: #{tpu_custom_call.1} parent=5 // pred_check
        %p458 = pneg %p457
      $region50: #{tpu_custom_call.1} parent=5 // pred_check_branch
        %460 = sbr.rel (%p458) target = $region52
      $region51: #{tpu_custom_call.1} parent=5 // pred_region
        %s461 = ssub.s32 %s21, 2
        // Predicated region
        $region53: #{tpu_custom_call.1} parent=51 // pred_check
          %p462 = pneg %p113
        $region54: #{tpu_custom_call.1} parent=51 // pred_check_branch
          %464 = sbr.rel (%p462) target = $region56
        $region55: #{tpu_custom_call.1} parent=51 // pred_region
          %s465 = sand.u32 %s98, 1
          %s466 = scalar_lea.sflag [#allocation4], %s465
          %s467 = sand.u32 %s98, 1
          %s468 = smul.addr %s467, 4
          %s469 = scalar_lea.vmem [#allocation7], %s468
          %470 = dma.done %s466, 64
        $region56: #{tpu_custom_call.1} parent=51 // pred_fallthru
          _
        // Predicated region
        $region57: #{tpu_custom_call.1} parent=51 // pred_check
          %p471 = pneg %p141
        $region58: #{tpu_custom_call.1} parent=51 // pred_check_branch
          %473 = sbr.rel (%p471) target = $region60
        $region59: #{tpu_custom_call.1} parent=51 // pred_region
          %s474 = sand.u32 %s27, 1
          %s475 = scalar_lea.sflag [#allocation9], %s474
          %s476 = sand.u32 %s126, 1
          %s477 = smul.addr %s476, 4
          %s478 = scalar_lea.vmem [#allocation8], %s477
          %479 = dma.done %s475, 64
        $region60: #{tpu_custom_call.1} parent=51 // pred_fallthru
          _
        // Predicated region
        $region61: #{tpu_custom_call.1} parent=51 // pred_check
          %p480 = pneg %p169
        $region62: #{tpu_custom_call.1} parent=51 // pred_check_branch
          %482 = sbr.rel (%p480) target = $region64
        $region63: #{tpu_custom_call.1} parent=51 // pred_region
          %s483 = sand.u32 %s27, 1
          %s484 = scalar_lea.sflag [#allocation9], %s483
          %s485 = sand.u32 %s154, 1
          %s486 = smul.addr %s485, 4
          %s487 = scalar_lea.vmem [#allocation10], %s486
          %488 = dma.done %s484, 64
        $region64: #{tpu_custom_call.1} parent=51 // pred_fallthru
          _
      $region52: #{tpu_custom_call.1} parent=5 // pred_fallthru
        _
    $region6: #{tpu_custom_call.1} parent=1 // loop_footer
      %s25 = sadd.s32 1, %s21
    $region7: #{tpu_custom_call.1} parent=1 // loop_footer_branch
      %20 = sbr.rel target = $region3
    $region8: #{tpu_custom_call.1} parent=1 // loop_exit
      _
    %489 = vsyncpa [#allocation3], 1
    %s490 = scalar_lea.sflag [#allocation3], 1
    %491 = vsyncpa %s490, 1
    %492 = vsyncpa [#allocation6], 1
    %493 = vsyncpa [#allocation4], 1
    %s494 = scalar_lea.sflag [#allocation4], 1
    %495 = vsyncpa %s494, 1
    %496 = vsyncpa [#allocation9], 1
    %s497 = scalar_lea.sflag [#allocation9], 1
    %498 = vsyncpa %s497, 1

</llo_original>
